<compile_context>
chip_gen: v6e
topology: v6e:2x2x1
jax: 0.10.0
libtpu: 0.0.40
codegen_flags: <defaults>
</compile_context>

<pallas_src>
import jax
import jax.numpy as jnp
from jax.experimental import pallas as pl
from jax.experimental.pallas import tpu as pltpu


def _bag_kernel(wmix_ref, x_ref, o_ref):
    """Grid = (batch, t_tile); no model axis in the grid.

    wmix_ref : (N, SC, C)       weight-folded per-model mixes (VMEM-resident)
    x_ref    : (1, C, TILE_T)   audio tile for this (batch, t_tile)
    o_ref    : (1, SC, TILE_T)  bagged output tile (single store, no RMW)
    """
    n_models, _, c_dim = wmix_ref.shape

    # The bag is linear: sum the (tiny) per-model mixes first.  Static
    # unrolled loop over N; negligible next to the HBM-bound tile traffic.
    w_tot = wmix_ref[0].astype(jnp.float32)
    for m in range(1, n_models):
        w_tot = w_tot + wmix_ref[m].astype(jnp.float32)

    xt = x_ref[0].astype(jnp.float32)            # (C, TILE_T), f32 accumulation

    # C broadcast FMAs on the VPU (C = audio channels, typically 2).  Whole
    # tile computed as one expression -> exactly one store to o_ref.
    acc = w_tot[:, 0:1] * xt[0:1, :]
    for c in range(1, c_dim):
        acc = acc + w_tot[:, c:c + 1] * xt[c:c + 1, :]
    o_ref[0] = acc.astype(o_ref.dtype)


def _choose_time_tiling(T, tile_t):
    """Return (tile, padded_T).  Prefers no padding: full-extent tile when
    T <= tile_t, else the largest 128-multiple divisor of T that is <= tile_t.
    Falls back to padding only if no such divisor exists (rare)."""
    if T <= tile_t:
        return T, T                              # one full-extent tile
    if T % 128 == 0:
        cand = (tile_t // 128) * 128
        while cand >= 128:
            if T % cand == 0:
                return cand, T
            cand -= 128
    tile = max(128, (tile_t // 128) * 128)
    return tile, pl.cdiv(T, tile) * tile


def bag_of_models_apply(x, wmix, weights, *, tile_t=32768):
    """x: (B, C, T); wmix: (N, S*C, C); weights: (N, S).

    Returns (B, S, C, T) = sum_i weights[i,s] * model_i(x)[s] / sum_i weights[i,s]
    """
    B, C, T = x.shape
    N, SC, Cw = wmix.shape
    S = weights.shape[1]
    assert Cw == C and SC == S * C and weights.shape[0] == N

    # Per-source bag normalization (exactly the apply_model division).  The
    # denom==0 -> 1 guard is a deliberate deviation from demucs (which would
    # divide by zero); it only triggers if a source's total bag weight is 0.
    denom = jnp.sum(weights, axis=0, keepdims=True)
    denom = jnp.where(denom == 0.0, 1.0, denom)
    wnorm = weights / denom                                     # (N, S)
    # wmix rows MUST be source-major (row = s*C + c): both the repeat below and
    # the final reshape to (B, S, C, T) assume this layout.
    wbag = jnp.repeat(wnorm, C, axis=1)                         # (N, S*C)
    # Fold the (normalized) bag weight into each model's mixing matrix.
    wmix_scaled = (wmix * wbag[:, :, None]).astype(jnp.float32)

    tile, t_pad = _choose_time_tiling(T, tile_t)
    if t_pad != T:
        # Last-resort fallback (costs an extra HBM pass); typical shapes
        # (T <= tile_t, or T a multiple of 128) never hit this.
        x = jnp.pad(x, ((0, 0), (0, 0), (0, t_pad - T)))

    out_dtype = x.dtype    # pass bf16 x for bf16 I/O on v6e/v7x; f32 accum in-kernel

    out = pl.pallas_call(
        _bag_kernel,
        out_shape=jax.ShapeDtypeStruct((B, SC, t_pad), out_dtype),
        grid_spec=pltpu.PrefetchScalarGridSpec(
            num_scalar_prefetch=0,
            grid=(B, t_pad // tile),
            in_specs=[
                # Tiny weight tensor, constant block index -> DMA'd once and
                # VMEM-resident for the entire grid.
                pl.BlockSpec((N, SC, C), lambda b, t: (0, 0, 0)),
                # Lane-dense audio tile.
                pl.BlockSpec((1, C, tile), lambda b, t: (b, 0, t)),
            ],
            # Lane-dense output tile; written exactly once per grid step.
            out_specs=pl.BlockSpec((1, SC, tile), lambda b, t: (b, 0, t)),
        ),
        compiler_params=pltpu.CompilerParams(
            # Both axes parallel -> megacore-shardable on v7x's 2 TensorCores.
            dimension_semantics=("parallel", "parallel"),
        ),
    )(wmix_scaled, x)

    if t_pad != T:
        out = out[:, :, :T]
    return out.reshape(B, S, C, T)


def _reference(x, wmix, weights):
    B, C, T = x.shape
    N, SC, _ = wmix.shape
    S = weights.shape[1]
    per_model = jnp.einsum("nkc,bct->bnkt", wmix, x)                  # (B, N, S*C, T)
    denom = jnp.sum(weights, axis=0, keepdims=True)
    denom = jnp.where(denom == 0.0, 1.0, denom)
    wnorm = weights / denom                                           # (N, S)
    wbag = jnp.repeat(wnorm, C, axis=1)                               # (N, S*C)
    out = jnp.einsum("bnkt,nk->bkt", per_model, wbag)
    return out.reshape(B, S, C, T)


if __name__ == "__main__":
    # Small shapes consistent with BagOfModels: N models, S sources,
    # C audio channels, time T.
    B, C, T = 2, 2, 4096
    N, S = 3, 4

    key = jax.random.PRNGKey(0)
    kx, kw = jax.random.split(key)
    x = jax.random.normal(kx, (B, C, T), dtype=jnp.float32)
    # Deterministic synthetic "model" parameters (one 1x1 mix per model).
    wmix = jax.random.normal(kw, (N, S * C, C), dtype=jnp.float32) * 0.5
    # Per-model, per-source bag weights (as in BagOfModels.weights).
    weights = jnp.asarray(
        [[1.0, 2.0, 0.5, 1.5],
         [0.5, 1.0, 1.0, 1.0],
         [2.0, 0.5, 1.5, 0.5]], dtype=jnp.float32)

    out = bag_of_models_apply(x, wmix, weights)
    out = jax.block_until_ready(out)

    ref = _reference(x, wmix, weights)
    assert out.shape == (B, S, C, T)
    assert jnp.allclose(out, ref, atol=1e-5, rtol=1e-5), "mismatch vs reference"

    print("KERNEL_OK")
</pallas_src>

<mosaic_0001>
module attributes {stable_mosaic.version = 11 : i64} {
  func.func @_bag_kernel(%arg0: i32, %arg1: i32, %arg2: memref<3x8x2xf32, #tpu.memory_space<vmem>>, %arg3: memref<1x2x4096xf32, #tpu.memory_space<vmem>>, %arg4: memref<1x8x4096xf32, #tpu.memory_space<vmem>>) attributes {dimension_semantics = [#tpu.dimension_semantics<parallel>, #tpu.dimension_semantics<parallel>], iteration_bounds = array<i64: 2, 1>, scalar_prefetch = 0 : i64, scratch_operands = 0 : i64, tpu.core_type = #tpu.core_type<tc>, window_params = [{pipeline_mode = #tpu.pipeline_mode<synchronous>, transform_indices = @transform_0, window_bounds = array<i64: 3, 8, 2>}, {transform_indices = @transform_1, window_bounds = array<i64: 1, 2, 4096>}, {transform_indices = @transform_2, window_bounds = array<i64: 1, 8, 4096>}]} {
    %c0 = arith.constant 0 : index
    %c0_0 = arith.constant 0 : index
    %c0_1 = arith.constant 0 : index
    %0 = vector.load %arg2[%c0, %c0_0, %c0_1] : memref<3x8x2xf32, #tpu.memory_space<vmem>>, vector<1x8x2xf32>
    %1 = vector.shape_cast %0 : vector<1x8x2xf32> to vector<8x2xf32>
    %c1 = arith.constant 1 : index
    %c0_2 = arith.constant 0 : index
    %c0_3 = arith.constant 0 : index
    %2 = vector.load %arg2[%c1, %c0_2, %c0_3] : memref<3x8x2xf32, #tpu.memory_space<vmem>>, vector<1x8x2xf32>
    %3 = vector.shape_cast %2 : vector<1x8x2xf32> to vector<8x2xf32>
    %4 = arith.addf %1, %3 : vector<8x2xf32>
    %c2 = arith.constant 2 : index
    %c0_4 = arith.constant 0 : index
    %c0_5 = arith.constant 0 : index
    %5 = vector.load %arg2[%c2, %c0_4, %c0_5] : memref<3x8x2xf32, #tpu.memory_space<vmem>>, vector<1x8x2xf32>
    %6 = vector.shape_cast %5 : vector<1x8x2xf32> to vector<8x2xf32>
    %7 = arith.addf %4, %6 : vector<8x2xf32>
    %c0_6 = arith.constant 0 : index
    %c0_7 = arith.constant 0 : index
    %c0_8 = arith.constant 0 : index
    %8 = vector.load %arg3[%c0_6, %c0_7, %c0_8] : memref<1x2x4096xf32, #tpu.memory_space<vmem>>, vector<1x2x4096xf32>
    %9 = vector.shape_cast %8 : vector<1x2x4096xf32> to vector<2x4096xf32>
    %10 = vector.extract_strided_slice %7 {offsets = [0, 0], sizes = [8, 1], strides = [1, 1]} : vector<8x2xf32> to vector<8x1xf32>
    %11 = vector.extract_strided_slice %9 {offsets = [0, 0], sizes = [1, 4096], strides = [1, 1]} : vector<2x4096xf32> to vector<1x4096xf32>
    %12 = vector.broadcast %10 : vector<8x1xf32> to vector<8x4096xf32>
    %13 = vector.broadcast %11 : vector<1x4096xf32> to vector<8x4096xf32>
    %14 = arith.mulf %12, %13 : vector<8x4096xf32>
    %15 = vector.extract_strided_slice %7 {offsets = [0, 1], sizes = [8, 1], strides = [1, 1]} : vector<8x2xf32> to vector<8x1xf32>
    %16 = vector.extract_strided_slice %9 {offsets = [1, 0], sizes = [1, 4096], strides = [1, 1]} : vector<2x4096xf32> to vector<1x4096xf32>
    %17 = vector.broadcast %15 : vector<8x1xf32> to vector<8x4096xf32>
    %18 = vector.broadcast %16 : vector<1x4096xf32> to vector<8x4096xf32>
    %19 = arith.mulf %17, %18 : vector<8x4096xf32>
    %20 = arith.addf %14, %19 : vector<8x4096xf32>
    %c0_9 = arith.constant 0 : index
    %c0_10 = arith.constant 0 : index
    %c0_11 = arith.constant 0 : index
    %21 = vector.load %arg4[%c0_9, %c0_10, %c0_11] : memref<1x8x4096xf32, #tpu.memory_space<vmem>>, vector<1x8x4096xf32>
    %22 = vector.shape_cast %21 : vector<1x8x4096xf32> to vector<8x4096xf32>
    %23 = vector.shape_cast %20 : vector<8x4096xf32> to vector<1x8x4096xf32>
    tpu.vector_store %arg4[%c0_9, %c0_10, %c0_11], %23 {strides = array<i32>} : memref<1x8x4096xf32, #tpu.memory_space<vmem>>, vector<1x8x4096xf32>,
    return
  }
  func.func @transform_0(%arg0: i32, %arg1: i32) -> (i32, i32, i32) {
    %c0_i32 = arith.constant 0 : i32
    %c0_i32_0 = arith.constant 0 : i32
    %c0_i32_1 = arith.constant 0 : i32
    %c0_i32_2 = arith.constant 0 : i32
    return %c0_i32, %c0_i32_0, %c0_i32_1 : i32, i32, i32
  }
  func.func @transform_1(%arg0: i32, %arg1: i32) -> (i32, i32, i32) {
    %c0_i32 = arith.constant 0 : i32
    %c0_i32_0 = arith.constant 0 : i32
    return %arg0, %c0_i32, %arg1 : i32, i32, i32
  }
  func.func @transform_2(%arg0: i32, %arg1: i32) -> (i32, i32, i32) {
    %c0_i32 = arith.constant 0 : i32
    %c0_i32_0 = arith.constant 0 : i32
    return %arg0, %c0_i32, %arg1 : i32, i32, i32
  }
}

</mosaic_0001>

<llo_original>
// kernel: tpu_custom_call.1
$region0: #{tpu_custom_call.1}
  #allocation0 [shape = 'u32[]', space=smem, size = 0x4, offset = 0x4, fixed_abs, tag = 'smem constant byte address 0x4 - core index']
  #allocation1 [shape = 'u32[144,128]{1,0:T(1,128)}', space=vmem, size = 0x12000, scoped, tag = 'internal scratch']
  %s0 = inlined_call_operand.vmem [shape: f32[3,8,2], index: 0, kind: input, shape index: {}]
  %s1 = inlined_call_operand.hbm [shape: f32[2,2,4096], index: 1, kind: input, shape index: {}]
  %s2 = inlined_call_operand.hbm [shape: f32[2,8,4096], index: 2, kind: output, shape index: {}]
  %s3 = sld [smem:[#allocation0]]
  $region45: #{tpu_custom_call.1} parent=0
    _
  %s5 = ssub.s32 1, %s3
  %s6 = scalar_select 0, %s5, %s3
  $region1: #{tpu_custom_call.1} parent=0
    #allocation2 [shape = 'u8[65536]{0}', space=vmem, size = 0x10000, scoped, tag = 'input window, operand 1']
    #allocation3 [shape = 's32[2]{0}', space=sflag, size = 0x8, scoped, tag = 'scoped memory for tpu_custom_call.1']
    #allocation4 [shape = 's32[2]{0}', space=sflag, size = 0x8, scoped, tag = 'scoped memory for tpu_custom_call.1']
    #allocation5 [shape = 'u8[262144]{0}', space=vmem, size = 0x40000, scoped, tag = 'output window, operand 0']
    %7 = vsyncpa [#allocation3], 0
    %s8 = scalar_lea.sflag [#allocation3], 1
    %9 = vsyncpa %s8, 0
    %10 = vsyncpa [#allocation4], 0
    %s11 = scalar_lea.sflag [#allocation4], 1
    %12 = vsyncpa %s11, 0
    loop: start=0, step=1, limit=4
    $region2: #{tpu_custom_call.1} parent=1 // loop_pre_header
      _
    $region3: #{tpu_custom_call.1} parent=1 // loop_header
      %s14 = sphi 0, %s18
      %p15 = scmp.ge.s32.totalorder %s14, 4
      %s21 = sphi 0, %s33
      %s22 = sphi 0, %s29
      %s23 = sphi 0, %s21
      %s24 = sphi 0, %s22
      %s25 = sphi 0, %s23
      %s26 = sphi 0, %s24
      %s34 = sphi 0, %s34
      %s36 = sphi 0, %s34
      %s37 = sphi 0, %s36
      %s51 = sphi 0, %s37
      %s59 = sphi 0, %s61
      %s62 = sphi 0, %s59
      %s63 = sphi 0, %s62
      %s79 = sphi 0, %s63
      %s87 = sphi 0, %s89
      %s90 = sphi 0, %s87
      %s91 = sphi 0, %s90
      %s107 = sphi 0, %s91
    $region4: #{tpu_custom_call.1} parent=1 // loop_header_branch
      %17 = sbr.rel (%p15) target = $region8
    $region5: #{tpu_custom_call.1} parent=1 // loop_body
      %s19 = ssub.s32 %s14, 1
      %s20 = ssub.s32 %s14, 2
      %s27 = sadd.s32 1, %s22
      %p28 = scmp.ge.s32.totalorder %s27, 1
      %s29 = scalar_select %p28, 0, %s27
      %s30 = sadd.s32 1, %s21
      %s31 = scalar_select %p28, %s30, %s21
      %p32 = scmp.ge.s32.totalorder %s31, 2
      %s33 = scalar_select %p32, 0, %s31
      %s35 = sadd.s32 %s34, 1
      %p38 = scmp.eq.s32.totalorder %s14, 1
      %p39 = scmp.ne.s32.totalorder %s34, %s36
      %p40 = scmp.eq.s32.totalorder %s14, 0
      %p41 = por %p39, %p40
      %p42 = scmp.ne.s32.totalorder %s34, %s36
      %p43 = scmp.eq.s32.totalorder %s19, 1
      %p44 = por %p42, %p43
      %p45 = scmp.ne.s32.totalorder %s36, %s37
      %p46 = scmp.eq.s32.totalorder %s19, 0
      %p47 = por %p45, %p46
      %p48 = scmp.ne.s32.totalorder %s36, %s37
      %p49 = scmp.eq.s32.totalorder %s20, 1
      %p50 = por %p48, %p49
      %p52 = scmp.ne.s32.totalorder %s37, %s51
      %p53 = scmp.eq.s32.totalorder %s20, 0
      %p54 = por %p52, %p53
      %s55 = ssub.s32 %s21, %s33
      %s56 = ssub.s32 %s22, %s29
      %s57 = sor.u32 %s55, %s56
      %p58 = scmp.eq.s32.totalorder %s57, 0
      %s60 = sadd.s32 %s59, 1
      %s61 = scalar_select %p58, %s59, %s60
      %p64 = pneg %p58
      %p65 = scmp.eq.s32.totalorder %s14, 1
      %p66 = por %p64, %p65
      %p67 = scmp.ne.s32.totalorder %s59, %s62
      %p68 = scmp.eq.s32.totalorder %s14, 0
      %p69 = por %p67, %p68
      %p70 = scmp.ne.s32.totalorder %s59, %s62
      %p71 = scmp.eq.s32.totalorder %s19, 1
      %p72 = por %p70, %p71
      %p73 = scmp.ne.s32.totalorder %s62, %s63
      %p74 = scmp.eq.s32.totalorder %s19, 0
      %p75 = por %p73, %p74
      %p76 = scmp.ne.s32.totalorder %s62, %s63
      %p77 = scmp.eq.s32.totalorder %s20, 1
      %p78 = por %p76, %p77
      %p80 = scmp.ne.s32.totalorder %s63, %s79
      %p81 = scmp.eq.s32.totalorder %s20, 0
      %p82 = por %p80, %p81
      %s83 = ssub.s32 %s21, %s33
      %s84 = ssub.s32 %s22, %s29
      %s85 = sor.u32 %s83, %s84
      %p86 = scmp.eq.s32.totalorder %s85, 0
      %s88 = sadd.s32 %s87, 1
      %s89 = scalar_select %p86, %s87, %s88
      %p92 = pneg %p86
      %p93 = scmp.eq.s32.totalorder %s14, 1
      %p94 = por %p92, %p93
      %p95 = scmp.ne.s32.totalorder %s87, %s90
      %p96 = scmp.eq.s32.totalorder %s14, 0
      %p97 = por %p95, %p96
      %p98 = scmp.ne.s32.totalorder %s87, %s90
      %p99 = scmp.eq.s32.totalorder %s19, 1
      %p100 = por %p98, %p99
      %p101 = scmp.ne.s32.totalorder %s90, %s91
      %p102 = scmp.eq.s32.totalorder %s19, 0
      %p103 = por %p101, %p102
      %p104 = scmp.ne.s32.totalorder %s90, %s91
      %p105 = scmp.eq.s32.totalorder %s20, 1
      %p106 = por %p104, %p105
      %p108 = scmp.ne.s32.totalorder %s91, %s107
      %p109 = scmp.eq.s32.totalorder %s20, 0
      %p110 = por %p108, %p109
      %p111 = scmp.le.s32.totalorder 1, %s14
      %p112 = scmp.lt.s32.totalorder %s14, 3
      %p113 = pnand %p111, %p112
      %p114 = pneg %p113
      // Predicated region
      $region9: #{tpu_custom_call.1} parent=5 // pred_check
        _
      $region10: #{tpu_custom_call.1} parent=5 // pred_check_branch
        %116 = sbr.rel (%p113) target = $region12
      $region11: #{tpu_custom_call.1} parent=5 // pred_region
        %s117 = ssub.s32 %s14, 1
        // Predicated region
        $region13: #{tpu_custom_call.1} parent=11 // pred_check
          %p118 = pneg %p47
        $region14: #{tpu_custom_call.1} parent=11 // pred_check_branch
          %120 = sbr.rel (%p118) target = $region16
        $region15: #{tpu_custom_call.1} parent=11 // pred_region
          _
        $region16: #{tpu_custom_call.1} parent=11 // pred_fallthru
          _
      $region12: #{tpu_custom_call.1} parent=5 // pred_fallthru
        _
      %p121 = scmp.lt.s32.totalorder %s14, 2
      // Predicated region
      $region17: #{tpu_custom_call.1} parent=5 // pred_check
        %p122 = pneg %p121
      $region18: #{tpu_custom_call.1} parent=5 // pred_check_branch
        %124 = sbr.rel (%p122) target = $region20
      $region19: #{tpu_custom_call.1} parent=5 // pred_region
        // Predicated region
        $region21: #{tpu_custom_call.1} parent=19 // pred_check
          %p125 = pneg %p69
        $region22: #{tpu_custom_call.1} parent=19 // pred_check_branch
          %127 = sbr.rel (%p125) target = $region24
        $region23: #{tpu_custom_call.1} parent=19 // pred_region
          %s128 = sand.u32 %s59, 1
          %s129 = scalar_lea.sflag [#allocation3], %s128
          %s130 = sand.u32 %s59, 1
          %s131 = smul.addr %s130, 64
          %s132 = scalar_lea.vmem [#allocation2], %s131
          %s133 = smul.u32 32, %s22
          %s135 = ssub.s32 1024, 1024
          %136 = vsyncadd %s129, %s135
          %s137 = smul.addr %s21, 32
          %s138 = sadd.s32 %s133, %s137
          %s139 = smul.addr %s138, 32
          %s140 = scalar_lea.hbm %s1, %s139
          %s142 = sshll.u32 %s132, 4
          %s143 = int_to_ptr.vmem [resolvable:$true] %s142
          %145 = dma.hbm_to_vmem [thread:$0]  %s140, 1024, %s143, %s129
        $region24: #{tpu_custom_call.1} parent=19 // pred_fallthru
          _
      $region20: #{tpu_custom_call.1} parent=5 // pred_fallthru
        _
      %p146 = scmp.le.s32.totalorder 1, %s14
      %p147 = scmp.lt.s32.totalorder %s14, 3
      %p148 = pnand %p146, %p147
      %p149 = pneg %p148
      // Predicated region
      $region25: #{tpu_custom_call.1} parent=5 // pred_check
        _
      $region26: #{tpu_custom_call.1} parent=5 // pred_check_branch
        %151 = sbr.rel (%p148) target = $region28
      $region27: #{tpu_custom_call.1} parent=5 // pred_region
        %s152 = ssub.s32 %s14, 1
        %s153 = sand.u32 %s62, 1
        %s154 = scalar_lea.sflag [#allocation3], %s153
        %s155 = sand.u32 %s62, 1
        %s156 = smul.addr %s155, 64
        %s157 = scalar_lea.vmem [#allocation2], %s156
        // Predicated region
        $region29: #{tpu_custom_call.1} parent=27 // pred_check
          %p158 = pneg %p75
        $region30: #{tpu_custom_call.1} parent=27 // pred_check_branch
          %160 = sbr.rel (%p158) target = $region32
        $region31: #{tpu_custom_call.1} parent=27 // pred_region
          %161 = dma.done %s154, 1024
        $region32: #{tpu_custom_call.1} parent=27 // pred_fallthru
          _
        %p162 = pneg %p47
        %p163 = pneg %p44
        %s164 = sand.u32 %s62, 1
        %s165 = scalar_lea.sflag [#allocation3], %s164
        %s166 = sand.u32 %s62, 1
        %s167 = smul.addr %s166, 64
        %s168 = scalar_lea.vmem [#allocation2], %s167
        %p169 = pneg %p75
        %p170 = pneg %p72
        %p171 = pneg %p103
        %p172 = pneg %p100
        %s173 = sand.u32 %s90, 1
        %s174 = scalar_lea.sflag [#allocation4], %s173
        %s175 = sand.u32 %s90, 1
        %s176 = smul.addr %s175, 256
        %s177 = scalar_lea.vmem [#allocation5], %s176
        %s178 = smul.u32 32, %s24
        %s179 = smul.u32 32, %s24
        %v180 = vld [vmem:[%s0] sm:$0xff]
        %s181 = scalar_lea.vmem %s0, 8
        %v182 = vld [vmem:[%s181] sm:$0xff]
        %v183 = vadd.f32 %v180, %v182
        %s184 = scalar_lea.vmem %s0, 16
        %v185 = vld [vmem:[%s184] sm:$0xff]
        %v186 = vadd.f32 %v183, %v185
        %v187 = vld [vmem:[%s157] sm:$0xff]
        %v188 = vld [vmem:[%s157 + $0x8] sm:$0xff]
        %v189 = vld [vmem:[%s157 + $0x10] sm:$0xff]
        %v190 = vld [vmem:[%s157 + $0x18] sm:$0xff]
        %v191 = vld [vmem:[%s157 + $0x20] sm:$0xff]
        %v192 = vld [vmem:[%s157 + $0x28] sm:$0xff]
        %v193 = vld [vmem:[%s157 + $0x30] sm:$0xff]
        %v194 = vld [vmem:[%s157 + $0x38] sm:$0xff]
        %196 = vset.pattern.permute.xlu0 0
        %197 = vperm.xlu0 %196, %v186
        %v198 = vpop.permute.xlu0 %197
        %v208 = vlaneseq
        %v209 = vshrl.u32 %v208, 7
        %v210 = vsub.s32 0, %v209
        %v211 = vrot.slane %v187, %v210
        %v212 = vlaneseq
        %v213 = vshrl.u32 %v212, 7
        %v214 = vsub.s32 2, %v213
        %v215 = vrot.slane %v187, %v214
        %v216 = vlaneseq
        %v217 = vshrl.u32 %v216, 7
        %v218 = vsub.s32 4, %v217
        %v219 = vrot.slane %v187, %v218
        %v220 = vlaneseq
        %v221 = vshrl.u32 %v220, 7
        %v222 = vsub.s32 6, %v221
        %v223 = vrot.slane %v187, %v222
        %v224 = vlaneseq
        %v225 = vshrl.u32 %v224, 7
        %v226 = vsub.s32 0, %v225
        %v227 = vrot.slane %v188, %v226
        %v228 = vlaneseq
        %v229 = vshrl.u32 %v228, 7
        %v230 = vsub.s32 2, %v229
        %v231 = vrot.slane %v188, %v230
        %v232 = vlaneseq
        %v233 = vshrl.u32 %v232, 7
        %v234 = vsub.s32 4, %v233
        %v235 = vrot.slane %v188, %v234
        %v236 = vlaneseq
        %v237 = vshrl.u32 %v236, 7
        %v238 = vsub.s32 6, %v237
        %v239 = vrot.slane %v188, %v238
        %v240 = vlaneseq
        %v241 = vshrl.u32 %v240, 7
        %v242 = vsub.s32 0, %v241
        %v243 = vrot.slane %v189, %v242
        %v244 = vlaneseq
        %v245 = vshrl.u32 %v244, 7
        %v246 = vsub.s32 2, %v245
        %v247 = vrot.slane %v189, %v246
        %v248 = vlaneseq
        %v249 = vshrl.u32 %v248, 7
        %v250 = vsub.s32 4, %v249
        %v251 = vrot.slane %v189, %v250
        %v252 = vlaneseq
        %v253 = vshrl.u32 %v252, 7
        %v254 = vsub.s32 6, %v253
        %v255 = vrot.slane %v189, %v254
        %v256 = vlaneseq
        %v257 = vshrl.u32 %v256, 7
        %v258 = vsub.s32 0, %v257
        %v259 = vrot.slane %v190, %v258
        %v260 = vlaneseq
        %v261 = vshrl.u32 %v260, 7
        %v262 = vsub.s32 2, %v261
        %v263 = vrot.slane %v190, %v262
        %v264 = vlaneseq
        %v265 = vshrl.u32 %v264, 7
        %v266 = vsub.s32 4, %v265
        %v267 = vrot.slane %v190, %v266
        %v268 = vlaneseq
        %v269 = vshrl.u32 %v268, 7
        %v270 = vsub.s32 6, %v269
        %v271 = vrot.slane %v190, %v270
        %v272 = vlaneseq
        %v273 = vshrl.u32 %v272, 7
        %v274 = vsub.s32 0, %v273
        %v275 = vrot.slane %v191, %v274
        %v276 = vlaneseq
        %v277 = vshrl.u32 %v276, 7
        %v278 = vsub.s32 2, %v277
        %v279 = vrot.slane %v191, %v278
        %v280 = vlaneseq
        %v281 = vshrl.u32 %v280, 7
        %v282 = vsub.s32 4, %v281
        %v283 = vrot.slane %v191, %v282
        %v284 = vlaneseq
        %v285 = vshrl.u32 %v284, 7
        %v286 = vsub.s32 6, %v285
        %v287 = vrot.slane %v191, %v286
        %v288 = vlaneseq
        %v289 = vshrl.u32 %v288, 7
        %v290 = vsub.s32 0, %v289
        %v291 = vrot.slane %v192, %v290
        %v292 = vlaneseq
        %v293 = vshrl.u32 %v292, 7
        %v294 = vsub.s32 2, %v293
        %v295 = vrot.slane %v192, %v294
        %v296 = vlaneseq
        %v297 = vshrl.u32 %v296, 7
        %v298 = vsub.s32 4, %v297
        %v299 = vrot.slane %v192, %v298
        %v300 = vlaneseq
        %v301 = vshrl.u32 %v300, 7
        %v302 = vsub.s32 6, %v301
        %v303 = vrot.slane %v192, %v302
        %v304 = vlaneseq
        %v305 = vshrl.u32 %v304, 7
        %v306 = vsub.s32 0, %v305
        %v307 = vrot.slane %v193, %v306
        %v308 = vlaneseq
        %v309 = vshrl.u32 %v308, 7
        %v310 = vsub.s32 2, %v309
        %v311 = vrot.slane %v193, %v310
        %v312 = vlaneseq
        %v313 = vshrl.u32 %v312, 7
        %v314 = vsub.s32 4, %v313
        %v315 = vrot.slane %v193, %v314
        %v316 = vlaneseq
        %v317 = vshrl.u32 %v316, 7
        %v318 = vsub.s32 6, %v317
        %v319 = vrot.slane %v193, %v318
        %v320 = vlaneseq
        %v321 = vshrl.u32 %v320, 7
        %v322 = vsub.s32 0, %v321
        %v323 = vrot.slane %v194, %v322
        %v324 = vlaneseq
        %v325 = vshrl.u32 %v324, 7
        %v326 = vsub.s32 2, %v325
        %v327 = vrot.slane %v194, %v326
        %v328 = vlaneseq
        %v329 = vshrl.u32 %v328, 7
        %v330 = vsub.s32 4, %v329
        %v331 = vrot.slane %v194, %v330
        %v332 = vlaneseq
        %v333 = vshrl.u32 %v332, 7
        %v334 = vsub.s32 6, %v333
        %v335 = vrot.slane %v194, %v334
        %v368 = vlaneseq
        %v369 = vshrl.u32 %v368, 7
        %v370 = vsub.s32 0, %v369
        %v371 = vrot.slane %v211, %v370
        %v372 = vlaneseq
        %v373 = vshrl.u32 %v372, 7
        %v374 = vsub.s32 0, %v373
        %v375 = vrot.slane %v215, %v374
        %v376 = vlaneseq
        %v377 = vshrl.u32 %v376, 7
        %v378 = vsub.s32 0, %v377
        %v379 = vrot.slane %v219, %v378
        %v380 = vlaneseq
        %v381 = vshrl.u32 %v380, 7
        %v382 = vsub.s32 0, %v381
        %v383 = vrot.slane %v223, %v382
        %v384 = vlaneseq
        %v385 = vshrl.u32 %v384, 7
        %v386 = vsub.s32 0, %v385
        %v387 = vrot.slane %v227, %v386
        %v388 = vlaneseq
        %v389 = vshrl.u32 %v388, 7
        %v390 = vsub.s32 0, %v389
        %v391 = vrot.slane %v231, %v390
        %v392 = vlaneseq
        %v393 = vshrl.u32 %v392, 7
        %v394 = vsub.s32 0, %v393
        %v395 = vrot.slane %v235, %v394
        %v396 = vlaneseq
        %v397 = vshrl.u32 %v396, 7
        %v398 = vsub.s32 0, %v397
        %v399 = vrot.slane %v239, %v398
        %v400 = vlaneseq
        %v401 = vshrl.u32 %v400, 7
        %v402 = vsub.s32 0, %v401
        %v403 = vrot.slane %v243, %v402
        %v404 = vlaneseq
        %v405 = vshrl.u32 %v404, 7
        %v406 = vsub.s32 0, %v405
        %v407 = vrot.slane %v247, %v406
        %v408 = vlaneseq
        %v409 = vshrl.u32 %v408, 7
        %v410 = vsub.s32 0, %v409
        %v411 = vrot.slane %v251, %v410
        %v412 = vlaneseq
        %v413 = vshrl.u32 %v412, 7
        %v414 = vsub.s32 0, %v413
        %v415 = vrot.slane %v255, %v414
        %v416 = vlaneseq
        %v417 = vshrl.u32 %v416, 7
        %v418 = vsub.s32 0, %v417
        %v419 = vrot.slane %v259, %v418
        %v420 = vlaneseq
        %v421 = vshrl.u32 %v420, 7
        %v422 = vsub.s32 0, %v421
        %v423 = vrot.slane %v263, %v422
        %v424 = vlaneseq
        %v425 = vshrl.u32 %v424, 7
        %v426 = vsub.s32 0, %v425
        %v427 = vrot.slane %v267, %v426
        %v428 = vlaneseq
        %v429 = vshrl.u32 %v428, 7
        %v430 = vsub.s32 0, %v429
        %v431 = vrot.slane %v271, %v430
        %v432 = vlaneseq
        %v433 = vshrl.u32 %v432, 7
        %v434 = vsub.s32 0, %v433
        %v435 = vrot.slane %v275, %v434
        %v436 = vlaneseq
        %v437 = vshrl.u32 %v436, 7
        %v438 = vsub.s32 0, %v437
        %v439 = vrot.slane %v279, %v438
        %v440 = vlaneseq
        %v441 = vshrl.u32 %v440, 7
        %v442 = vsub.s32 0, %v441
        %v443 = vrot.slane %v283, %v442
        %v444 = vlaneseq
        %v445 = vshrl.u32 %v444, 7
        %v446 = vsub.s32 0, %v445
        %v447 = vrot.slane %v287, %v446
        %v448 = vlaneseq
        %v449 = vshrl.u32 %v448, 7
        %v450 = vsub.s32 0, %v449
        %v451 = vrot.slane %v291, %v450
        %v452 = vlaneseq
        %v453 = vshrl.u32 %v452, 7
        %v454 = vsub.s32 0, %v453
        %v455 = vrot.slane %v295, %v454
        %v456 = vlaneseq
        %v457 = vshrl.u32 %v456, 7
        %v458 = vsub.s32 0, %v457
        %v459 = vrot.slane %v299, %v458
        %v460 = vlaneseq
        %v461 = vshrl.u32 %v460, 7
        %v462 = vsub.s32 0, %v461
        %v463 = vrot.slane %v303, %v462
        %v464 = vlaneseq
        %v465 = vshrl.u32 %v464, 7
        %v466 = vsub.s32 0, %v465
        %v467 = vrot.slane %v307, %v466
        %v468 = vlaneseq
        %v469 = vshrl.u32 %v468, 7
        %v470 = vsub.s32 0, %v469
        %v471 = vrot.slane %v311, %v470
        %v472 = vlaneseq
        %v473 = vshrl.u32 %v472, 7
        %v474 = vsub.s32 0, %v473
        %v475 = vrot.slane %v315, %v474
        %v476 = vlaneseq
        %v477 = vshrl.u32 %v476, 7
        %v478 = vsub.s32 0, %v477
        %v479 = vrot.slane %v319, %v478
        %v480 = vlaneseq
        %v481 = vshrl.u32 %v480, 7
        %v482 = vsub.s32 0, %v481
        %v483 = vrot.slane %v323, %v482
        %v484 = vlaneseq
        %v485 = vshrl.u32 %v484, 7
        %v486 = vsub.s32 0, %v485
        %v487 = vrot.slane %v327, %v486
        %v488 = vlaneseq
        %v489 = vshrl.u32 %v488, 7
        %v490 = vsub.s32 0, %v489
        %v491 = vrot.slane %v331, %v490
        %v492 = vlaneseq
        %v493 = vshrl.u32 %v492, 7
        %v494 = vsub.s32 0, %v493
        %v495 = vrot.slane %v335, %v494
        %v496 = vmul.f32 %v198, %v371
        %v497 = vmul.f32 %v198, %v375
        %v498 = vmul.f32 %v198, %v379
        %v499 = vmul.f32 %v198, %v383
        %v500 = vmul.f32 %v198, %v387
        %v501 = vmul.f32 %v198, %v391
        %v502 = vmul.f32 %v198, %v395
        %v503 = vmul.f32 %v198, %v399
        %v504 = vmul.f32 %v198, %v403
        %v505 = vmul.f32 %v198, %v407
        %v506 = vmul.f32 %v198, %v411
        %v507 = vmul.f32 %v198, %v415
        %v508 = vmul.f32 %v198, %v419
        %v509 = vmul.f32 %v198, %v423
        %v510 = vmul.f32 %v198, %v427
        %v511 = vmul.f32 %v198, %v431
        %v512 = vmul.f32 %v198, %v435
        %v513 = vmul.f32 %v198, %v439
        %v514 = vmul.f32 %v198, %v443
        %v515 = vmul.f32 %v198, %v447
        %v516 = vmul.f32 %v198, %v451
        %v517 = vmul.f32 %v198, %v455
        %v518 = vmul.f32 %v198, %v459
        %v519 = vmul.f32 %v198, %v463
        %v520 = vmul.f32 %v198, %v467
        %v521 = vmul.f32 %v198, %v471
        %v522 = vmul.f32 %v198, %v475
        %v523 = vmul.f32 %v198, %v479
        %v524 = vmul.f32 %v198, %v483
        %v525 = vmul.f32 %v198, %v487
        %v526 = vmul.f32 %v198, %v491
        %v527 = vmul.f32 %v198, %v495
        %528 = vset.pattern.permute.xlu0 1
        %529 = vperm.xlu0 %528, %v186
        %v530 = vpop.permute.xlu0 %529
        %v532 = vlaneseq
        %v533 = vshrl.u32 %v532, 7
        %v534 = vsub.s32 1, %v533
        %v535 = vrot.slane %v187, %v534
        %v536 = vlaneseq
        %v537 = vshrl.u32 %v536, 7
        %v538 = vsub.s32 3, %v537
        %v539 = vrot.slane %v187, %v538
        %v540 = vlaneseq
        %v541 = vshrl.u32 %v540, 7
        %v542 = vsub.s32 5, %v541
        %v543 = vrot.slane %v187, %v542
        %v544 = vlaneseq
        %v545 = vshrl.u32 %v544, 7
        %v546 = vsub.s32 7, %v545
        %v547 = vrot.slane %v187, %v546
        %v548 = vlaneseq
        %v549 = vshrl.u32 %v548, 7
        %v550 = vsub.s32 1, %v549
        %v551 = vrot.slane %v188, %v550
        %v552 = vlaneseq
        %v553 = vshrl.u32 %v552, 7
        %v554 = vsub.s32 3, %v553
        %v555 = vrot.slane %v188, %v554
        %v556 = vlaneseq
        %v557 = vshrl.u32 %v556, 7
        %v558 = vsub.s32 5, %v557
        %v559 = vrot.slane %v188, %v558
        %v560 = vlaneseq
        %v561 = vshrl.u32 %v560, 7
        %v562 = vsub.s32 7, %v561
        %v563 = vrot.slane %v188, %v562
        %v564 = vlaneseq
        %v565 = vshrl.u32 %v564, 7
        %v566 = vsub.s32 1, %v565
        %v567 = vrot.slane %v189, %v566
        %v568 = vlaneseq
        %v569 = vshrl.u32 %v568, 7
        %v570 = vsub.s32 3, %v569
        %v571 = vrot.slane %v189, %v570
        %v572 = vlaneseq
        %v573 = vshrl.u32 %v572, 7
        %v574 = vsub.s32 5, %v573
        %v575 = vrot.slane %v189, %v574
        %v576 = vlaneseq
        %v577 = vshrl.u32 %v576, 7
        %v578 = vsub.s32 7, %v577
        %v579 = vrot.slane %v189, %v578
        %v580 = vlaneseq
        %v581 = vshrl.u32 %v580, 7
        %v582 = vsub.s32 1, %v581
        %v583 = vrot.slane %v190, %v582
        %v584 = vlaneseq
        %v585 = vshrl.u32 %v584, 7
        %v586 = vsub.s32 3, %v585
        %v587 = vrot.slane %v190, %v586
        %v588 = vlaneseq
        %v589 = vshrl.u32 %v588, 7
        %v590 = vsub.s32 5, %v589
        %v591 = vrot.slane %v190, %v590
        %v592 = vlaneseq
        %v593 = vshrl.u32 %v592, 7
        %v594 = vsub.s32 7, %v593
        %v595 = vrot.slane %v190, %v594
        %v596 = vlaneseq
        %v597 = vshrl.u32 %v596, 7
        %v598 = vsub.s32 1, %v597
        %v599 = vrot.slane %v191, %v598
        %v600 = vlaneseq
        %v601 = vshrl.u32 %v600, 7
        %v602 = vsub.s32 3, %v601
        %v603 = vrot.slane %v191, %v602
        %v604 = vlaneseq
        %v605 = vshrl.u32 %v604, 7
        %v606 = vsub.s32 5, %v605
        %v607 = vrot.slane %v191, %v606
        %v608 = vlaneseq
        %v609 = vshrl.u32 %v608, 7
        %v610 = vsub.s32 7, %v609
        %v611 = vrot.slane %v191, %v610
        %v612 = vlaneseq
        %v613 = vshrl.u32 %v612, 7
        %v614 = vsub.s32 1, %v613
        %v615 = vrot.slane %v192, %v614
        %v616 = vlaneseq
        %v617 = vshrl.u32 %v616, 7
        %v618 = vsub.s32 3, %v617
        %v619 = vrot.slane %v192, %v618
        %v620 = vlaneseq
        %v621 = vshrl.u32 %v620, 7
        %v622 = vsub.s32 5, %v621
        %v623 = vrot.slane %v192, %v622
        %v624 = vlaneseq
        %v625 = vshrl.u32 %v624, 7
        %v626 = vsub.s32 7, %v625
        %v627 = vrot.slane %v192, %v626
        %v628 = vlaneseq
        %v629 = vshrl.u32 %v628, 7
        %v630 = vsub.s32 1, %v629
        %v631 = vrot.slane %v193, %v630
        %v632 = vlaneseq
        %v633 = vshrl.u32 %v632, 7
        %v634 = vsub.s32 3, %v633
        %v635 = vrot.slane %v193, %v634
        %v636 = vlaneseq
        %v637 = vshrl.u32 %v636, 7
        %v638 = vsub.s32 5, %v637
        %v639 = vrot.slane %v193, %v638
        %v640 = vlaneseq
        %v641 = vshrl.u32 %v640, 7
        %v642 = vsub.s32 7, %v641
        %v643 = vrot.slane %v193, %v642
        %v644 = vlaneseq
        %v645 = vshrl.u32 %v644, 7
        %v646 = vsub.s32 1, %v645
        %v647 = vrot.slane %v194, %v646
        %v648 = vlaneseq
        %v649 = vshrl.u32 %v648, 7
        %v650 = vsub.s32 3, %v649
        %v651 = vrot.slane %v194, %v650
        %v652 = vlaneseq
        %v653 = vshrl.u32 %v652, 7
        %v654 = vsub.s32 5, %v653
        %v655 = vrot.slane %v194, %v654
        %v656 = vlaneseq
        %v657 = vshrl.u32 %v656, 7
        %v658 = vsub.s32 7, %v657
        %v659 = vrot.slane %v194, %v658
        %v692 = vlaneseq
        %v693 = vshrl.u32 %v692, 7
        %v694 = vsub.s32 1, %v693
        %v695 = vrot.slane %v535, %v694
        %v696 = vlaneseq
        %v697 = vshrl.u32 %v696, 7
        %v698 = vsub.s32 1, %v697
        %v699 = vrot.slane %v539, %v698
        %v700 = vlaneseq
        %v701 = vshrl.u32 %v700, 7
        %v702 = vsub.s32 1, %v701
        %v703 = vrot.slane %v543, %v702
        %v704 = vlaneseq
        %v705 = vshrl.u32 %v704, 7
        %v706 = vsub.s32 1, %v705
        %v707 = vrot.slane %v547, %v706
        %v708 = vlaneseq
        %v709 = vshrl.u32 %v708, 7
        %v710 = vsub.s32 1, %v709
        %v711 = vrot.slane %v551, %v710
        %v712 = vlaneseq
        %v713 = vshrl.u32 %v712, 7
        %v714 = vsub.s32 1, %v713
        %v715 = vrot.slane %v555, %v714
        %v716 = vlaneseq
        %v717 = vshrl.u32 %v716, 7
        %v718 = vsub.s32 1, %v717
        %v719 = vrot.slane %v559, %v718
        %v720 = vlaneseq
        %v721 = vshrl.u32 %v720, 7
        %v722 = vsub.s32 1, %v721
        %v723 = vrot.slane %v563, %v722
        %v724 = vlaneseq
        %v725 = vshrl.u32 %v724, 7
        %v726 = vsub.s32 1, %v725
        %v727 = vrot.slane %v567, %v726
        %v728 = vlaneseq
        %v729 = vshrl.u32 %v728, 7
        %v730 = vsub.s32 1, %v729
        %v731 = vrot.slane %v571, %v730
        %v732 = vlaneseq
        %v733 = vshrl.u32 %v732, 7
        %v734 = vsub.s32 1, %v733
        %v735 = vrot.slane %v575, %v734
        %v736 = vlaneseq
        %v737 = vshrl.u32 %v736, 7
        %v738 = vsub.s32 1, %v737
        %v739 = vrot.slane %v579, %v738
        %v740 = vlaneseq
        %v741 = vshrl.u32 %v740, 7
        %v742 = vsub.s32 1, %v741
        %v743 = vrot.slane %v583, %v742
        %v744 = vlaneseq
        %v745 = vshrl.u32 %v744, 7
        %v746 = vsub.s32 1, %v745
        %v747 = vrot.slane %v587, %v746
        %v748 = vlaneseq
        %v749 = vshrl.u32 %v748, 7
        %v750 = vsub.s32 1, %v749
        %v751 = vrot.slane %v591, %v750
        %v752 = vlaneseq
        %v753 = vshrl.u32 %v752, 7
        %v754 = vsub.s32 1, %v753
        %v755 = vrot.slane %v595, %v754
        %v756 = vlaneseq
        %v757 = vshrl.u32 %v756, 7
        %v758 = vsub.s32 1, %v757
        %v759 = vrot.slane %v599, %v758
        %v760 = vlaneseq
        %v761 = vshrl.u32 %v760, 7
        %v762 = vsub.s32 1, %v761
        %v763 = vrot.slane %v603, %v762
        %v764 = vlaneseq
        %v765 = vshrl.u32 %v764, 7
        %v766 = vsub.s32 1, %v765
        %v767 = vrot.slane %v607, %v766
        %v768 = vlaneseq
        %v769 = vshrl.u32 %v768, 7
        %v770 = vsub.s32 1, %v769
        %v771 = vrot.slane %v611, %v770
        %v772 = vlaneseq
        %v773 = vshrl.u32 %v772, 7
        %v774 = vsub.s32 1, %v773
        %v775 = vrot.slane %v615, %v774
        %v776 = vlaneseq
        %v777 = vshrl.u32 %v776, 7
        %v778 = vsub.s32 1, %v777
        %v779 = vrot.slane %v619, %v778
        %v780 = vlaneseq
        %v781 = vshrl.u32 %v780, 7
        %v782 = vsub.s32 1, %v781
        %v783 = vrot.slane %v623, %v782
        %v784 = vlaneseq
        %v785 = vshrl.u32 %v784, 7
        %v786 = vsub.s32 1, %v785
        %v787 = vrot.slane %v627, %v786
        %v788 = vlaneseq
        %v789 = vshrl.u32 %v788, 7
        %v790 = vsub.s32 1, %v789
        %v791 = vrot.slane %v631, %v790
        %v792 = vlaneseq
        %v793 = vshrl.u32 %v792, 7
        %v794 = vsub.s32 1, %v793
        %v795 = vrot.slane %v635, %v794
        %v796 = vlaneseq
        %v797 = vshrl.u32 %v796, 7
        %v798 = vsub.s32 1, %v797
        %v799 = vrot.slane %v639, %v798
        %v800 = vlaneseq
        %v801 = vshrl.u32 %v800, 7
        %v802 = vsub.s32 1, %v801
        %v803 = vrot.slane %v643, %v802
        %v804 = vlaneseq
        %v805 = vshrl.u32 %v804, 7
        %v806 = vsub.s32 1, %v805
        %v807 = vrot.slane %v647, %v806
        %v808 = vlaneseq
        %v809 = vshrl.u32 %v808, 7
        %v810 = vsub.s32 1, %v809
        %v811 = vrot.slane %v651, %v810
        %v812 = vlaneseq
        %v813 = vshrl.u32 %v812, 7
        %v814 = vsub.s32 1, %v813
        %v815 = vrot.slane %v655, %v814
        %v816 = vlaneseq
        %v817 = vshrl.u32 %v816, 7
        %v818 = vsub.s32 1, %v817
        %v819 = vrot.slane %v659, %v818
        %v820 = vmul.f32 %v530, %v695
        %v821 = vmul.f32 %v530, %v699
        %v822 = vmul.f32 %v530, %v703
        %v823 = vmul.f32 %v530, %v707
        %v824 = vmul.f32 %v530, %v711
        %v825 = vmul.f32 %v530, %v715
        %v826 = vmul.f32 %v530, %v719
        %v827 = vmul.f32 %v530, %v723
        %v828 = vmul.f32 %v530, %v727
        %v829 = vmul.f32 %v530, %v731
        %v830 = vmul.f32 %v530, %v735
        %v831 = vmul.f32 %v530, %v739
        %v832 = vmul.f32 %v530, %v743
        %v833 = vmul.f32 %v530, %v747
        %v834 = vmul.f32 %v530, %v751
        %v835 = vmul.f32 %v530, %v755
        %v836 = vmul.f32 %v530, %v759
        %v837 = vmul.f32 %v530, %v763
        %v838 = vmul.f32 %v530, %v767
        %v839 = vmul.f32 %v530, %v771
        %v840 = vmul.f32 %v530, %v775
        %v841 = vmul.f32 %v530, %v779
        %v842 = vmul.f32 %v530, %v783
        %v843 = vmul.f32 %v530, %v787
        %v844 = vmul.f32 %v530, %v791
        %v845 = vmul.f32 %v530, %v795
        %v846 = vmul.f32 %v530, %v799
        %v847 = vmul.f32 %v530, %v803
        %v848 = vmul.f32 %v530, %v807
        %v849 = vmul.f32 %v530, %v811
        %v850 = vmul.f32 %v530, %v815
        %v851 = vmul.f32 %v530, %v819
        %v852 = vadd.f32 %v496, %v820
        %v853 = vadd.f32 %v497, %v821
        %v854 = vadd.f32 %v498, %v822
        %v855 = vadd.f32 %v499, %v823
        %v856 = vadd.f32 %v500, %v824
        %v857 = vadd.f32 %v501, %v825
        %v858 = vadd.f32 %v502, %v826
        %v859 = vadd.f32 %v503, %v827
        %v860 = vadd.f32 %v504, %v828
        %v861 = vadd.f32 %v505, %v829
        %v862 = vadd.f32 %v506, %v830
        %v863 = vadd.f32 %v507, %v831
        %v864 = vadd.f32 %v508, %v832
        %v865 = vadd.f32 %v509, %v833
        %v866 = vadd.f32 %v510, %v834
        %v867 = vadd.f32 %v511, %v835
        %v868 = vadd.f32 %v512, %v836
        %v869 = vadd.f32 %v513, %v837
        %v870 = vadd.f32 %v514, %v838
        %v871 = vadd.f32 %v515, %v839
        %v872 = vadd.f32 %v516, %v840
        %v873 = vadd.f32 %v517, %v841
        %v874 = vadd.f32 %v518, %v842
        %v875 = vadd.f32 %v519, %v843
        %v876 = vadd.f32 %v520, %v844
        %v877 = vadd.f32 %v521, %v845
        %v878 = vadd.f32 %v522, %v846
        %v879 = vadd.f32 %v523, %v847
        %v880 = vadd.f32 %v524, %v848
        %v881 = vadd.f32 %v525, %v849
        %v882 = vadd.f32 %v526, %v850
        %v883 = vadd.f32 %v527, %v851
        %884 = vst [vmem:[%s177] sm:$0xff] %v852
        %885 = vst [vmem:[%s177 + $0x8] sm:$0xff] %v853
        %886 = vst [vmem:[%s177 + $0x10] sm:$0xff] %v854
        %887 = vst [vmem:[%s177 + $0x18] sm:$0xff] %v855
        %888 = vst [vmem:[%s177 + $0x20] sm:$0xff] %v856
        %889 = vst [vmem:[%s177 + $0x28] sm:$0xff] %v857
        %890 = vst [vmem:[%s177 + $0x30] sm:$0xff] %v858
        %891 = vst [vmem:[%s177 + $0x38] sm:$0xff] %v859
        %892 = vst [vmem:[%s177 + $0x40] sm:$0xff] %v860
        %893 = vst [vmem:[%s177 + $0x48] sm:$0xff] %v861
        %894 = vst [vmem:[%s177 + $0x50] sm:$0xff] %v862
        %895 = vst [vmem:[%s177 + $0x58] sm:$0xff] %v863
        %896 = vst [vmem:[%s177 + $0x60] sm:$0xff] %v864
        %897 = vst [vmem:[%s177 + $0x68] sm:$0xff] %v865
        %898 = vst [vmem:[%s177 + $0x70] sm:$0xff] %v866
        %899 = vst [vmem:[%s177 + $0x78] sm:$0xff] %v867
        %900 = vst [vmem:[%s177 + $0x80] sm:$0xff] %v868
        %901 = vst [vmem:[%s177 + $0x88] sm:$0xff] %v869
        %902 = vst [vmem:[%s177 + $0x90] sm:$0xff] %v870
        %903 = vst [vmem:[%s177 + $0x98] sm:$0xff] %v871
        %904 = vst [vmem:[%s177 + $0xa0] sm:$0xff] %v872
        %905 = vst [vmem:[%s177 + $0xa8] sm:$0xff] %v873
        %906 = vst [vmem:[%s177 + $0xb0] sm:$0xff] %v874
        %907 = vst [vmem:[%s177 + $0xb8] sm:$0xff] %v875
        %908 = vst [vmem:[%s177 + $0xc0] sm:$0xff] %v876
        %909 = vst [vmem:[%s177 + $0xc8] sm:$0xff] %v877
        %910 = vst [vmem:[%s177 + $0xd0] sm:$0xff] %v878
        %911 = vst [vmem:[%s177 + $0xd8] sm:$0xff] %v879
        %912 = vst [vmem:[%s177 + $0xe0] sm:$0xff] %v880
        %913 = vst [vmem:[%s177 + $0xe8] sm:$0xff] %v881
        %914 = vst [vmem:[%s177 + $0xf0] sm:$0xff] %v882
        %915 = vst [vmem:[%s177 + $0xf8] sm:$0xff] %v883
        %s916 = sand.u32 %s90, 1
        %s917 = scalar_lea.sflag [#allocation4], %s916
        %s918 = sand.u32 %s90, 1
        %s919 = smul.addr %s918, 256
        %s920 = scalar_lea.vmem [#allocation5], %s919
        // Predicated region
        $region33: #{tpu_custom_call.1} parent=27 // pred_check
          %p921 = pneg %p100
        $region34: #{tpu_custom_call.1} parent=27 // pred_check_branch
          %923 = sbr.rel (%p921) target = $region36
        $region35: #{tpu_custom_call.1} parent=27 // pred_region
          %s924 = smul.u32 32, %s24
          %s926 = ssub.s32 4096, 4096
          %927 = vsyncadd %s917, %s926
          %s928 = smul.addr %s23, 32
          %s929 = sadd.s32 %s924, %s928
          %s930 = smul.addr %s929, 128
          %s931 = scalar_lea.hbm %s2, %s930
          %s933 = sshll.u32 %s920, 4
          %s934 = int_to_ptr.vmem [resolvable:$true] %s933
          %936 = dma.vmem_to_hbm [thread:$0]  %s934, 4096, %s931, %s917
        $region36: #{tpu_custom_call.1} parent=27 // pred_fallthru
          _
      $region28: #{tpu_custom_call.1} parent=5 // pred_fallthru
        _
      %p937 = scmp.le.s32.totalorder 2, %s14
      // Predicated region
      $region37: #{tpu_custom_call.1} parent=5 // pred_check
        %p938 = pneg %p937
      $region38: #{tpu_custom_call.1} parent=5 // pred_check_branch
        %940 = sbr.rel (%p938) target = $region40
      $region39: #{tpu_custom_call.1} parent=5 // pred_region
        %s941 = ssub.s32 %s14, 2
        // Predicated region
        $region41: #{tpu_custom_call.1} parent=39 // pred_check
          %p942 = pneg %p106
        $region42: #{tpu_custom_call.1} parent=39 // pred_check_branch
          %944 = sbr.rel (%p942) target = $region44
        $region43: #{tpu_custom_call.1} parent=39 // pred_region
          %s945 = sand.u32 %s91, 1
          %s946 = scalar_lea.sflag [#allocation4], %s945
          %s947 = sand.u32 %s91, 1
          %s948 = smul.addr %s947, 256
          %s949 = scalar_lea.vmem [#allocation5], %s948
          %950 = dma.done %s946, 4096
        $region44: #{tpu_custom_call.1} parent=39 // pred_fallthru
          _
      $region40: #{tpu_custom_call.1} parent=5 // pred_fallthru
        _
    $region6: #{tpu_custom_call.1} parent=1 // loop_footer
      %s18 = sadd.s32 1, %s14
    $region7: #{tpu_custom_call.1} parent=1 // loop_footer_branch
      %13 = sbr.rel target = $region3
    $region8: #{tpu_custom_call.1} parent=1 // loop_exit
      _
    %951 = vsyncpa [#allocation3], 1
    %s952 = scalar_lea.sflag [#allocation3], 1
    %953 = vsyncpa %s952, 1
    %954 = vsyncpa [#allocation4], 1
    %s955 = scalar_lea.sflag [#allocation4], 1
    %956 = vsyncpa %s955, 1

</llo_original>
